<compile_context>
chip_gen: v6e
topology: v6e:2x2x1
jax: 0.10.0
libtpu: 0.0.40
codegen_flags: <defaults>
</compile_context>

<pallas_src>
import jax
import jax.numpy as jnp
from jax import lax
from jax.experimental import pallas as pl
from jax.experimental.pallas import tpu as pltpu


def _make_fire_kernel(H, W, B, Sq, E1, E3):
    HW = H * W
    Eo = E1 + E3

    def fire_kernel(x_ref, wsq_ref, bsq_ref, wcomb_ref, bcomb_ref, o_ref):
        # x_ref:     (B, Cin, HW) bf16   channel-major activations
        # wsq_ref:   (Sq, Cin)    bf16   squeeze 1x1 weight
        # bsq_ref:   (Sq, 1)      f32
        # wcomb_ref: (Eo, 9*Sq)   bf16   fused [expand1x1 | expand3x3] im2col weight
        # bcomb_ref: (Eo, 1)      f32
        # o_ref:     (B, Eo, HW)  bf16

        # ---- edge masks: built once per grid step at (1, HW), broadcast once,
        # reused for every image in the block.
        lane = lax.broadcasted_iota(jnp.int32, (1, HW), 1)
        if (W & (W - 1)) == 0:
            col = jnp.bitwise_and(lane, W - 1)            # lane % W (W = 2^k)
        else:
            col = lane % W  # TODO(synk): validate integer-mod lowering for general W
        row_ok = (lane >= W, None, lane < HW - W)         # dy = 0, 1, 2
        col_ok = (col >= 1, None, col <= W - 2)           # dx = 0, 1, 2

        tap_masks = []
        for dy in range(3):
            for dx in range(3):
                m = None
                if row_ok[dy] is not None:
                    m = row_ok[dy]
                if col_ok[dx] is not None:
                    m = col_ok[dx] if m is None else jnp.logical_and(m, col_ok[dx])
                if m is not None:
                    m = jnp.broadcast_to(m, (Sq, HW))     # hoisted broadcast
                tap_masks.append(m)

        wsq = wsq_ref[...]
        bsq = bsq_ref[...]
        wcomb = wcomb_ref[...]
        bcomb = bcomb_ref[...]

        # B is small (VMEM-budgeted), so the per-image pipelines are unrolled at
        # trace time and every matmul stays a plain 2-D MXU op.
        for b in range(B):
            x = x_ref[b]                                  # (Cin, HW) bf16

            # squeeze 1x1 conv + ReLU (f32 accumulation / bias / relu)
            s = jnp.dot(wsq, x, preferred_element_type=jnp.float32)
            s = jnp.maximum(s + bsq, 0.0)                 # (Sq, HW) f32

            # 9 im2col taps: lane rolls (XLU) + static edge masks (VPU),
            # each tap cast to bf16 immediately (half staging footprint).
            taps = []
            t = 0
            for dy in range(3):
                for dx in range(3):
                    delta = (dy - 1) * W + (dx - 1)
                    if delta == 0:
                        tap = s
                    else:
                        tap = pltpu.roll(s, shift=(-delta) % HW, axis=1)
                    if tap_masks[t] is not None:
                        tap = jnp.where(tap_masks[t], tap, 0.0)
                    taps.append(tap.astype(jnp.bfloat16))
                    t += 1
            big = jnp.concatenate(taps, axis=0)           # (9*Sq, HW) bf16

            # ONE fused matmul: rows [:E1] hold w1 in the centre-tap columns,
            # rows [E1:] hold the packed 3x3 weights.
            e = jnp.dot(wcomb, big, preferred_element_type=jnp.float32)
            e = jnp.maximum(e + bcomb, 0.0)               # (Eo, HW) f32
            o_ref[b] = e.astype(o_ref.dtype)              # one lane-dense store

    return fire_kernel


def _pick_images_per_block(N, Cin, Sq, Eo, HW,
                           *, budget_bytes=20 << 20, unroll_cap=8):
    """Images per grid step: biggest block fitting the VMEM budget, but keep
    >= 2 grid steps when N > 1 (v7x megacore) and bound trace-time unroll."""
    per_img = (2 * Cin * HW * 2        # bf16 input block, double-buffered
               + 2 * Eo * HW * 2       # bf16 output block, double-buffered
               + 9 * Sq * HW * 2       # im2col staging (bf16)
               + Sq * HW * 4           # squeeze activations (f32)
               + Eo * HW * 4)          # f32 accumulator before the bf16 store
    b_mem = max(1, budget_bytes // per_img)
    b_par = (N + 1) // 2 if N > 1 else 1
    return int(max(1, min(N, b_mem, b_par, unroll_cap)))


def fire_forward(x_nchw, wsq, bsq, w1, b1, w3, b3):
    """x_nchw: (N, Cin, H, W). Weights in PyTorch OIHW layout.
    Returns (N, E1+E3, H, W) in bf16 (f32 accumulation inside the kernel)."""
    N, Cin, H, W = x_nchw.shape
    Sq = wsq.shape[0]
    E1 = w1.shape[0]
    E3 = w3.shape[0]
    Eo = E1 + E3
    HW = H * W

    B = _pick_images_per_block(N, Cin, Sq, Eo, HW)
    n_blocks = (N + B - 1) // B
    N_pad = n_blocks * B

    # channel-major packing: activations need only a reshape (no HBM transpose)
    x_k = x_nchw.reshape(N, Cin, HW).astype(jnp.bfloat16)
    if N_pad != N:
        x_k = jnp.pad(x_k, ((0, N_pad - N), (0, 0), (0, 0)))

    wsq_k = wsq[:, :, 0, 0].astype(jnp.bfloat16)                    # (Sq, Cin)
    bsq_k = bsq.reshape(Sq, 1).astype(jnp.float32)

    # fused expand weight: rows [:E1] = expand1x1 in the centre-tap (dy=dx=1)
    # K-slice; rows [E1:] = expand3x3 packed (o, dy, dx, c) -> (E3, 9*Sq)
    w1_k = w1[:, :, 0, 0].astype(jnp.float32)                       # (E1, Sq)
    w3_k = jnp.transpose(w3, (0, 2, 3, 1)).reshape(E3, 9 * Sq).astype(jnp.float32)
    wcomb = jnp.zeros((Eo, 9 * Sq), jnp.float32)
    wcomb = wcomb.at[:E1, 4 * Sq:5 * Sq].set(w1_k)
    wcomb = wcomb.at[E1:, :].set(w3_k)
    wcomb = wcomb.astype(jnp.bfloat16)
    bcomb = jnp.concatenate([b1, b3]).reshape(Eo, 1).astype(jnp.float32)

    out = pl.pallas_call(
        _make_fire_kernel(H, W, B, Sq, E1, E3),
        out_shape=jax.ShapeDtypeStruct((N_pad, Eo, HW), jnp.bfloat16),
        grid_spec=pltpu.PrefetchScalarGridSpec(
            num_scalar_prefetch=0,
            grid=(n_blocks,),
            in_specs=[
                pl.BlockSpec((B, Cin, HW), lambda n: (n, 0, 0)),
                # grid-invariant index maps: weight/bias tiles stay resident
                # across grid steps (no per-step re-DMA).
                pl.BlockSpec((Sq, Cin), lambda n: (0, 0)),
                pl.BlockSpec((Sq, 1), lambda n: (0, 0)),
                pl.BlockSpec((Eo, 9 * Sq), lambda n: (0, 0)),
                pl.BlockSpec((Eo, 1), lambda n: (0, 0)),
            ],
            out_specs=pl.BlockSpec((B, Eo, HW), lambda n: (n, 0, 0)),
        ),
        # Block budget (~20 MiB) stays under the 32 MiB default scoped VMEM on
        # v5e/v6e/v7x, so no vmem_limit_bytes override is needed.
        compiler_params=pltpu.CompilerParams(
            dimension_semantics=("parallel",)),  # shards batch over v7x's 2 TCs
    )(x_k, wsq_k, bsq_k, wcomb, bcomb)

    if N_pad != N:
        out = out[:N]
    return out.reshape(N, Eo, H, W)  # still NCHW; reshape only


def fire_reference(x, wsq, bsq, w1, b1, w3, b3):
    """Plain-JAX f32 reference matching torch.nn.Conv2d semantics (NCHW/OIHW)."""
    dn = ('NCHW', 'OIHW', 'NCHW')
    s = lax.conv_general_dilated(x, wsq, (1, 1), 'VALID', dimension_numbers=dn)
    s = jnp.maximum(s + bsq[None, :, None, None], 0.0)
    e1 = lax.conv_general_dilated(s, w1, (1, 1), 'VALID', dimension_numbers=dn)
    e1 = jnp.maximum(e1 + b1[None, :, None, None], 0.0)
    e3 = lax.conv_general_dilated(s, w3, (1, 1), ((1, 1), (1, 1)),
                                  dimension_numbers=dn)
    e3 = jnp.maximum(e3 + b3[None, :, None, None], 0.0)
    return jnp.concatenate([e1, e3], axis=1)


if __name__ == "__main__":
    # Small Fire config: inplanes=4, squeeze=8, expand1x1=16, expand3x3=16
    N, Cin, H, W = 2, 4, 16, 16
    Sq, E1, E3 = 8, 16, 16

    key = jax.random.PRNGKey(0)
    ks = jax.random.split(key, 7)
    x = jax.random.normal(ks[0], (N, Cin, H, W), jnp.float32)

    # Deterministic synthetic parameters (PyTorch Conv2d OIHW weight layout).
    wsq = jax.random.normal(ks[1], (Sq, Cin, 1, 1), jnp.float32) * 0.2
    bsq = jax.random.normal(ks[2], (Sq,), jnp.float32) * 0.1
    w1 = jax.random.normal(ks[3], (E1, Sq, 1, 1), jnp.float32) * 0.2
    b1 = jax.random.normal(ks[4], (E1,), jnp.float32) * 0.1
    w3 = jax.random.normal(ks[5], (E3, Sq, 3, 3), jnp.float32) * 0.1
    b3 = jax.random.normal(ks[6], (E3,), jnp.float32) * 0.1

    out = fire_forward(x, wsq, bsq, w1, b1, w3, b3)
    out = jax.block_until_ready(out)

    ref = fire_reference(x, wsq, bsq, w1, b1, w3, b3)
    assert out.shape == (N, E1 + E3, H, W), out.shape
    # bf16 MXU operands + bf16 output store (f32 accumulation) -> loosened
    # tolerance vs the f32 reference.
    out_f32 = out.astype(jnp.float32)
    assert jnp.allclose(out_f32, ref, atol=6e-2, rtol=6e-2), \
        f"max abs err {jnp.max(jnp.abs(out_f32 - ref))}"

    print("KERNEL_OK")
</pallas_src>

<mosaic_0001>
module attributes {stable_mosaic.version = 11 : i64} {
  func.func @fire_kernel(%arg0: i32, %arg1: memref<1x4x256xbf16, #tpu.memory_space<vmem>>, %arg2: memref<8x4xbf16, #tpu.memory_space<vmem>>, %arg3: memref<8x1xf32, #tpu.memory_space<vmem>>, %arg4: memref<32x72xbf16, #tpu.memory_space<vmem>>, %arg5: memref<32x1xf32, #tpu.memory_space<vmem>>, %arg6: memref<1x32x256xbf16, #tpu.memory_space<vmem>>) attributes {dimension_semantics = [#tpu.dimension_semantics<parallel>], iteration_bounds = array<i64: 2>, scalar_prefetch = 0 : i64, scratch_operands = 0 : i64, tpu.core_type = #tpu.core_type<tc>, window_params = [{transform_indices = @transform_0, window_bounds = array<i64: 1, 4, 256>}, {pipeline_mode = #tpu.pipeline_mode<synchronous>, transform_indices = @transform_1, window_bounds = array<i64: 8, 4>}, {pipeline_mode = #tpu.pipeline_mode<synchronous>, transform_indices = @transform_2, window_bounds = array<i64: 8, 1>}, {pipeline_mode = #tpu.pipeline_mode<synchronous>, transform_indices = @transform_3, window_bounds = array<i64: 32, 72>}, {pipeline_mode = #tpu.pipeline_mode<synchronous>, transform_indices = @transform_4, window_bounds = array<i64: 32, 1>}, {transform_indices = @transform_5, window_bounds = array<i64: 1, 32, 256>}]} {
    %0 = tpu.iota {dimensions = array<i32: 1>} : vector<1x256xi32>
    %c15_i32 = arith.constant 15 : i32
    %1 = vector.broadcast %c15_i32 : i32 to vector<1x256xi32>
    %2 = arith.andi %0, %1 : vector<1x256xi32>
    %c16_i32 = arith.constant 16 : i32
    %3 = vector.broadcast %c16_i32 : i32 to vector<1x256xi32>
    %4 = arith.cmpi sge, %0, %3 : vector<1x256xi32>
    %c240_i32 = arith.constant 240 : i32
    %5 = vector.broadcast %c240_i32 : i32 to vector<1x256xi32>
    %6 = arith.cmpi slt, %0, %5 : vector<1x256xi32>
    %c1_i32 = arith.constant 1 : i32
    %7 = vector.broadcast %c1_i32 : i32 to vector<1x256xi32>
    %8 = arith.cmpi sge, %2, %7 : vector<1x256xi32>
    %c14_i32 = arith.constant 14 : i32
    %9 = vector.broadcast %c14_i32 : i32 to vector<1x256xi32>
    %10 = arith.cmpi sle, %2, %9 : vector<1x256xi32>
    %11 = arith.andi %4, %8 : vector<1x256xi1>
    %12 = vector.shape_cast %11 : vector<1x256xi1> to vector<1x256xi1>
    %13 = vector.broadcast %12 : vector<1x256xi1> to vector<8x256xi1>
    %14 = vector.shape_cast %4 : vector<1x256xi1> to vector<1x256xi1>
    %15 = vector.broadcast %14 : vector<1x256xi1> to vector<8x256xi1>
    %16 = arith.andi %4, %10 : vector<1x256xi1>
    %17 = vector.shape_cast %16 : vector<1x256xi1> to vector<1x256xi1>
    %18 = vector.broadcast %17 : vector<1x256xi1> to vector<8x256xi1>
    %19 = vector.shape_cast %8 : vector<1x256xi1> to vector<1x256xi1>
    %20 = vector.broadcast %19 : vector<1x256xi1> to vector<8x256xi1>
    %21 = vector.shape_cast %10 : vector<1x256xi1> to vector<1x256xi1>
    %22 = vector.broadcast %21 : vector<1x256xi1> to vector<8x256xi1>
    %23 = arith.andi %6, %8 : vector<1x256xi1>
    %24 = vector.shape_cast %23 : vector<1x256xi1> to vector<1x256xi1>
    %25 = vector.broadcast %24 : vector<1x256xi1> to vector<8x256xi1>
    %26 = vector.shape_cast %6 : vector<1x256xi1> to vector<1x256xi1>
    %27 = vector.broadcast %26 : vector<1x256xi1> to vector<8x256xi1>
    %28 = arith.andi %6, %10 : vector<1x256xi1>
    %29 = vector.shape_cast %28 : vector<1x256xi1> to vector<1x256xi1>
    %30 = vector.broadcast %29 : vector<1x256xi1> to vector<8x256xi1>
    %c0 = arith.constant 0 : index
    %c0_0 = arith.constant 0 : index
    %31 = vector.load %arg2[%c0, %c0_0] : memref<8x4xbf16, #tpu.memory_space<vmem>>, vector<8x4xbf16>
    %c0_1 = arith.constant 0 : index
    %c0_2 = arith.constant 0 : index
    %32 = vector.load %arg3[%c0_1, %c0_2] : memref<8x1xf32, #tpu.memory_space<vmem>>, vector<8x1xf32>
    %c0_3 = arith.constant 0 : index
    %c0_4 = arith.constant 0 : index
    %33 = vector.load %arg4[%c0_3, %c0_4] : memref<32x72xbf16, #tpu.memory_space<vmem>>, vector<32x72xbf16>
    %c0_5 = arith.constant 0 : index
    %c0_6 = arith.constant 0 : index
    %34 = vector.load %arg5[%c0_5, %c0_6] : memref<32x1xf32, #tpu.memory_space<vmem>>, vector<32x1xf32>
    %c0_7 = arith.constant 0 : index
    %c0_8 = arith.constant 0 : index
    %c0_9 = arith.constant 0 : index
    %35 = vector.load %arg1[%c0_7, %c0_8, %c0_9] : memref<1x4x256xbf16, #tpu.memory_space<vmem>>, vector<1x4x256xbf16>
    %36 = vector.shape_cast %35 : vector<1x4x256xbf16> to vector<4x256xbf16>
    %cst = arith.constant dense<0.000000e+00> : vector<8x256xf32>
    %37 = tpu.matmul %31, %36, %cst {dimension_numbers = #tpu.dot_dimension_numbers<[1], [0], [0], [1], [0, 0, 1, 1], [], []>} : vector<8x4xbf16>, vector<4x256xbf16>, vector<8x256xf32> -> vector<8x256xf32>
    %38 = vector.broadcast %32 : vector<8x1xf32> to vector<8x256xf32>
    %39 = arith.addf %37, %38 : vector<8x256xf32>
    %cst_10 = arith.constant 0.000000e+00 : f32
    %40 = vector.broadcast %cst_10 : f32 to vector<8x256xf32>
    %41 = arith.maximumf %39, %40 : vector<8x256xf32>
    %c17_i32 = arith.constant 17 : i32
    %42 = tpu.dynamic_rotate %41 by %c17_i32 dim 1 : vector<8x256xf32>, i32 -> vector<8x256xf32>
    %cst_11 = arith.constant 0.000000e+00 : f32
    %43 = vector.broadcast %cst_11 : f32 to vector<8x256xf32>
    %44 = arith.select %13, %42, %43 : vector<8x256xi1>, vector<8x256xf32>
    %45 = arith.truncf %44 : vector<8x256xf32> to vector<8x256xbf16>
    %c16_i32_12 = arith.constant 16 : i32
    %46 = tpu.dynamic_rotate %41 by %c16_i32_12 dim 1 : vector<8x256xf32>, i32 -> vector<8x256xf32>
    %cst_13 = arith.constant 0.000000e+00 : f32
    %47 = vector.broadcast %cst_13 : f32 to vector<8x256xf32>
    %48 = arith.select %15, %46, %47 : vector<8x256xi1>, vector<8x256xf32>
    %49 = arith.truncf %48 : vector<8x256xf32> to vector<8x256xbf16>
    %c15_i32_14 = arith.constant 15 : i32
    %50 = tpu.dynamic_rotate %41 by %c15_i32_14 dim 1 : vector<8x256xf32>, i32 -> vector<8x256xf32>
    %cst_15 = arith.constant 0.000000e+00 : f32
    %51 = vector.broadcast %cst_15 : f32 to vector<8x256xf32>
    %52 = arith.select %18, %50, %51 : vector<8x256xi1>, vector<8x256xf32>
    %53 = arith.truncf %52 : vector<8x256xf32> to vector<8x256xbf16>
    %c1_i32_16 = arith.constant 1 : i32
    %54 = tpu.dynamic_rotate %41 by %c1_i32_16 dim 1 : vector<8x256xf32>, i32 -> vector<8x256xf32>
    %cst_17 = arith.constant 0.000000e+00 : f32
    %55 = vector.broadcast %cst_17 : f32 to vector<8x256xf32>
    %56 = arith.select %20, %54, %55 : vector<8x256xi1>, vector<8x256xf32>
    %57 = arith.truncf %56 : vector<8x256xf32> to vector<8x256xbf16>
    %58 = arith.truncf %41 : vector<8x256xf32> to vector<8x256xbf16>
    %c255_i32 = arith.constant 255 : i32
    %59 = tpu.dynamic_rotate %41 by %c255_i32 dim 1 : vector<8x256xf32>, i32 -> vector<8x256xf32>
    %cst_18 = arith.constant 0.000000e+00 : f32
    %60 = vector.broadcast %cst_18 : f32 to vector<8x256xf32>
    %61 = arith.select %22, %59, %60 : vector<8x256xi1>, vector<8x256xf32>
    %62 = arith.truncf %61 : vector<8x256xf32> to vector<8x256xbf16>
    %c241_i32 = arith.constant 241 : i32
    %63 = tpu.dynamic_rotate %41 by %c241_i32 dim 1 : vector<8x256xf32>, i32 -> vector<8x256xf32>
    %cst_19 = arith.constant 0.000000e+00 : f32
    %64 = vector.broadcast %cst_19 : f32 to vector<8x256xf32>
    %65 = arith.select %25, %63, %64 : vector<8x256xi1>, vector<8x256xf32>
    %66 = arith.truncf %65 : vector<8x256xf32> to vector<8x256xbf16>
    %c240_i32_20 = arith.constant 240 : i32
    %67 = tpu.dynamic_rotate %41 by %c240_i32_20 dim 1 : vector<8x256xf32>, i32 -> vector<8x256xf32>
    %cst_21 = arith.constant 0.000000e+00 : f32
    %68 = vector.broadcast %cst_21 : f32 to vector<8x256xf32>
    %69 = arith.select %27, %67, %68 : vector<8x256xi1>, vector<8x256xf32>
    %70 = arith.truncf %69 : vector<8x256xf32> to vector<8x256xbf16>
    %c239_i32 = arith.constant 239 : i32
    %71 = tpu.dynamic_rotate %41 by %c239_i32 dim 1 : vector<8x256xf32>, i32 -> vector<8x256xf32>
    %cst_22 = arith.constant 0.000000e+00 : f32
    %72 = vector.broadcast %cst_22 : f32 to vector<8x256xf32>
    %73 = arith.select %30, %71, %72 : vector<8x256xi1>, vector<8x256xf32>
    %74 = arith.truncf %73 : vector<8x256xf32> to vector<8x256xbf16>
    %75 = tpu.concatenate %45, %49, %53, %57, %58, %62, %66, %70, %74 in 0 : vector<8x256xbf16>, vector<8x256xbf16>, vector<8x256xbf16>, vector<8x256xbf16>, vector<8x256xbf16>, vector<8x256xbf16>, vector<8x256xbf16>, vector<8x256xbf16>, vector<8x256xbf16> -> vector<72x256xbf16>
    %cst_23 = arith.constant dense<0.000000e+00> : vector<32x256xf32>
    %76 = tpu.matmul %33, %75, %cst_23 {dimension_numbers = #tpu.dot_dimension_numbers<[1], [0], [0], [1], [0, 0, 1, 1], [], []>} : vector<32x72xbf16>, vector<72x256xbf16>, vector<32x256xf32> -> vector<32x256xf32>
    %77 = vector.broadcast %34 : vector<32x1xf32> to vector<32x256xf32>
    %78 = arith.addf %76, %77 : vector<32x256xf32>
    %cst_24 = arith.constant 0.000000e+00 : f32
    %79 = vector.broadcast %cst_24 : f32 to vector<32x256xf32>
    %80 = arith.maximumf %78, %79 : vector<32x256xf32>
    %81 = arith.truncf %80 : vector<32x256xf32> to vector<32x256xbf16>
    %c0_25 = arith.constant 0 : index
    %c0_26 = arith.constant 0 : index
    %c0_27 = arith.constant 0 : index
    %82 = vector.load %arg6[%c0_25, %c0_26, %c0_27] : memref<1x32x256xbf16, #tpu.memory_space<vmem>>, vector<1x32x256xbf16>
    %83 = vector.shape_cast %82 : vector<1x32x256xbf16> to vector<32x256xbf16>
    %84 = vector.shape_cast %81 : vector<32x256xbf16> to vector<1x32x256xbf16>
    tpu.vector_store %arg6[%c0_25, %c0_26, %c0_27], %84 {strides = array<i32>} : memref<1x32x256xbf16, #tpu.memory_space<vmem>>, vector<1x32x256xbf16>,
    return
  }
  func.func @transform_0(%arg0: i32) -> (i32, i32, i32) {
    %c0_i32 = arith.constant 0 : i32
    %c0_i32_0 = arith.constant 0 : i32
    %c0_i32_1 = arith.constant 0 : i32
    return %arg0, %c0_i32, %c0_i32_0 : i32, i32, i32
  }
  func.func @transform_1(%arg0: i32) -> (i32, i32) {
    %c0_i32 = arith.constant 0 : i32
    %c0_i32_0 = arith.constant 0 : i32
    %c0_i32_1 = arith.constant 0 : i32
    return %c0_i32, %c0_i32_0 : i32, i32
  }
  func.func @transform_2(%arg0: i32) -> (i32, i32) {
    %c0_i32 = arith.constant 0 : i32
    %c0_i32_0 = arith.constant 0 : i32
    %c0_i32_1 = arith.constant 0 : i32
    return %c0_i32, %c0_i32_0 : i32, i32
  }
  func.func @transform_3(%arg0: i32) -> (i32, i32) {
    %c0_i32 = arith.constant 0 : i32
    %c0_i32_0 = arith.constant 0 : i32
    %c0_i32_1 = arith.constant 0 : i32
    return %c0_i32, %c0_i32_0 : i32, i32
  }
  func.func @transform_4(%arg0: i32) -> (i32, i32) {
    %c0_i32 = arith.constant 0 : i32
    %c0_i32_0 = arith.constant 0 : i32
    %c0_i32_1 = arith.constant 0 : i32
    return %c0_i32, %c0_i32_0 : i32, i32
  }
  func.func @transform_5(%arg0: i32) -> (i32, i32, i32) {
    %c0_i32 = arith.constant 0 : i32
    %c0_i32_0 = arith.constant 0 : i32
    %c0_i32_1 = arith.constant 0 : i32
    return %arg0, %c0_i32, %c0_i32_0 : i32, i32, i32
  }
}

</mosaic_0001>

<llo_original>
// kernel: tpu_custom_call.1
$region0: #{tpu_custom_call.1}
  #allocation0 [shape = 'u32[]', space=smem, size = 0x4, offset = 0x4, fixed_abs, tag = 'smem constant byte address 0x4 - core index']
  #allocation1 [shape = 'u32[144,128]{1,0:T(1,128)}', space=vmem, size = 0x12000, scoped, tag = 'internal scratch']
  %s0 = inlined_call_operand.vmem [shape: bf16[2,4,256], index: 0, kind: input, shape index: {}]
  %s1 = inlined_call_operand.vmem [shape: bf16[8,4], index: 1, kind: input, shape index: {}]
  %s2 = inlined_call_operand.vmem [shape: f32[8,1], index: 2, kind: input, shape index: {}]
  %s3 = inlined_call_operand.vmem [shape: bf16[32,72], index: 3, kind: input, shape index: {}]
  %s4 = inlined_call_operand.vmem [shape: f32[32,1], index: 4, kind: input, shape index: {}]
  %s5 = inlined_call_operand.hbm [shape: bf16[2,32,256], index: 5, kind: output, shape index: {}]
  %s6 = sld [smem:[#allocation0]]
  $region53: #{tpu_custom_call.1} parent=0
    _
  %s8 = ssub.s32 1, %s6
  %s9 = scalar_select 0, %s8, %s6
  $region1: #{tpu_custom_call.1} parent=0
    #allocation2 [shape = 'u8[32768]{0}', space=vmem, size = 0x8000, scoped, tag = 'output window, operand 0']
    #allocation3 [shape = 's32[2]{0}', space=sflag, size = 0x8, scoped, tag = 'scoped memory for tpu_custom_call.1']
    %10 = vsyncpa [#allocation3], 0
    %s11 = scalar_lea.sflag [#allocation3], 1
    %12 = vsyncpa %s11, 0
    loop: start=0, step=1, limit=4
    $region2: #{tpu_custom_call.1} parent=1 // loop_pre_header
      _
    $region3: #{tpu_custom_call.1} parent=1 // loop_header
      %s14 = sphi 0, %s18
      %p15 = scmp.ge.s32.totalorder %s14, 4
      %s24 = sphi 0, %s26
      %s27 = sphi 0, %s24
      %s28 = sphi 0, %s27
      %s44 = sphi 0, %s28
      %s48 = sphi 0, %s48
      %s50 = sphi 0, %s48
      %s51 = sphi 0, %s50
      %s65 = sphi 0, %s51
      %s69 = sphi 0, %s69
      %s71 = sphi 0, %s69
      %s72 = sphi 0, %s71
      %s86 = sphi 0, %s72
      %s90 = sphi 0, %s90
      %s92 = sphi 0, %s90
      %s93 = sphi 0, %s92
      %s107 = sphi 0, %s93
      %s111 = sphi 0, %s111
      %s113 = sphi 0, %s111
      %s114 = sphi 0, %s113
      %s128 = sphi 0, %s114
      %s134 = sphi 0, %s136
      %s137 = sphi 0, %s134
      %s138 = sphi 0, %s137
      %s154 = sphi 0, %s138
    $region4: #{tpu_custom_call.1} parent=1 // loop_header_branch
      %17 = sbr.rel (%p15) target = $region8
    $region5: #{tpu_custom_call.1} parent=1 // loop_body
      %s19 = ssub.s32 %s14, 1
      %s20 = ssub.s32 %s14, 2
      %s21 = sadd.s32 %s14, 1
      %s22 = ssub.s32 %s14, %s21
      %p23 = scmp.eq.s32.totalorder %s22, 0
      %s25 = sadd.s32 %s24, 1
      %s26 = scalar_select %p23, %s24, %s25
      %p29 = pneg %p23
      %p30 = scmp.eq.s32.totalorder %s14, 1
      %p31 = por %p29, %p30
      %p32 = scmp.ne.s32.totalorder %s24, %s27
      %p33 = scmp.eq.s32.totalorder %s14, 0
      %p34 = por %p32, %p33
      %p35 = scmp.ne.s32.totalorder %s24, %s27
      %p36 = scmp.eq.s32.totalorder %s19, 1
      %p37 = por %p35, %p36
      %p38 = scmp.ne.s32.totalorder %s27, %s28
      %p39 = scmp.eq.s32.totalorder %s19, 0
      %p40 = por %p38, %p39
      %p41 = scmp.ne.s32.totalorder %s27, %s28
      %p42 = scmp.eq.s32.totalorder %s20, 1
      %p43 = por %p41, %p42
      %p45 = scmp.ne.s32.totalorder %s28, %s44
      %p46 = scmp.eq.s32.totalorder %s20, 0
      %p47 = por %p45, %p46
      %s49 = sadd.s32 %s48, 1
      %p52 = scmp.eq.s32.totalorder %s14, 1
      %p53 = scmp.ne.s32.totalorder %s48, %s50
      %p54 = scmp.eq.s32.totalorder %s14, 0
      %p55 = por %p53, %p54
      %p56 = scmp.ne.s32.totalorder %s48, %s50
      %p57 = scmp.eq.s32.totalorder %s19, 1
      %p58 = por %p56, %p57
      %p59 = scmp.ne.s32.totalorder %s50, %s51
      %p60 = scmp.eq.s32.totalorder %s19, 0
      %p61 = por %p59, %p60
      %p62 = scmp.ne.s32.totalorder %s50, %s51
      %p63 = scmp.eq.s32.totalorder %s20, 1
      %p64 = por %p62, %p63
      %p66 = scmp.ne.s32.totalorder %s51, %s65
      %p67 = scmp.eq.s32.totalorder %s20, 0
      %p68 = por %p66, %p67
      %s70 = sadd.s32 %s69, 1
      %p73 = scmp.eq.s32.totalorder %s14, 1
      %p74 = scmp.ne.s32.totalorder %s69, %s71
      %p75 = scmp.eq.s32.totalorder %s14, 0
      %p76 = por %p74, %p75
      %p77 = scmp.ne.s32.totalorder %s69, %s71
      %p78 = scmp.eq.s32.totalorder %s19, 1
      %p79 = por %p77, %p78
      %p80 = scmp.ne.s32.totalorder %s71, %s72
      %p81 = scmp.eq.s32.totalorder %s19, 0
      %p82 = por %p80, %p81
      %p83 = scmp.ne.s32.totalorder %s71, %s72
      %p84 = scmp.eq.s32.totalorder %s20, 1
      %p85 = por %p83, %p84
      %p87 = scmp.ne.s32.totalorder %s72, %s86
      %p88 = scmp.eq.s32.totalorder %s20, 0
      %p89 = por %p87, %p88
      %s91 = sadd.s32 %s90, 1
      %p94 = scmp.eq.s32.totalorder %s14, 1
      %p95 = scmp.ne.s32.totalorder %s90, %s92
      %p96 = scmp.eq.s32.totalorder %s14, 0
      %p97 = por %p95, %p96
      %p98 = scmp.ne.s32.totalorder %s90, %s92
      %p99 = scmp.eq.s32.totalorder %s19, 1
      %p100 = por %p98, %p99
      %p101 = scmp.ne.s32.totalorder %s92, %s93
      %p102 = scmp.eq.s32.totalorder %s19, 0
      %p103 = por %p101, %p102
      %p104 = scmp.ne.s32.totalorder %s92, %s93
      %p105 = scmp.eq.s32.totalorder %s20, 1
      %p106 = por %p104, %p105
      %p108 = scmp.ne.s32.totalorder %s93, %s107
      %p109 = scmp.eq.s32.totalorder %s20, 0
      %p110 = por %p108, %p109
      %s112 = sadd.s32 %s111, 1
      %p115 = scmp.eq.s32.totalorder %s14, 1
      %p116 = scmp.ne.s32.totalorder %s111, %s113
      %p117 = scmp.eq.s32.totalorder %s14, 0
      %p118 = por %p116, %p117
      %p119 = scmp.ne.s32.totalorder %s111, %s113
      %p120 = scmp.eq.s32.totalorder %s19, 1
      %p121 = por %p119, %p120
      %p122 = scmp.ne.s32.totalorder %s113, %s114
      %p123 = scmp.eq.s32.totalorder %s19, 0
      %p124 = por %p122, %p123
      %p125 = scmp.ne.s32.totalorder %s113, %s114
      %p126 = scmp.eq.s32.totalorder %s20, 1
      %p127 = por %p125, %p126
      %p129 = scmp.ne.s32.totalorder %s114, %s128
      %p130 = scmp.eq.s32.totalorder %s20, 0
      %p131 = por %p129, %p130
      %s132 = ssub.s32 %s14, %s21
      %p133 = scmp.eq.s32.totalorder %s132, 0
      %s135 = sadd.s32 %s134, 1
      %s136 = scalar_select %p133, %s134, %s135
      %p139 = pneg %p133
      %p140 = scmp.eq.s32.totalorder %s14, 1
      %p141 = por %p139, %p140
      %p142 = scmp.ne.s32.totalorder %s134, %s137
      %p143 = scmp.eq.s32.totalorder %s14, 0
      %p144 = por %p142, %p143
      %p145 = scmp.ne.s32.totalorder %s134, %s137
      %p146 = scmp.eq.s32.totalorder %s19, 1
      %p147 = por %p145, %p146
      %p148 = scmp.ne.s32.totalorder %s137, %s138
      %p149 = scmp.eq.s32.totalorder %s19, 0
      %p150 = por %p148, %p149
      %p151 = scmp.ne.s32.totalorder %s137, %s138
      %p152 = scmp.eq.s32.totalorder %s20, 1
      %p153 = por %p151, %p152
      %p155 = scmp.ne.s32.totalorder %s138, %s154
      %p156 = scmp.eq.s32.totalorder %s20, 0
      %p157 = por %p155, %p156
      %p158 = scmp.le.s32.totalorder 1, %s14
      %p159 = scmp.lt.s32.totalorder %s14, 3
      %p160 = pnand %p158, %p159
      %p161 = pneg %p160
      // Predicated region
      $region9: #{tpu_custom_call.1} parent=5 // pred_check
        _
      $region10: #{tpu_custom_call.1} parent=5 // pred_check_branch
        %163 = sbr.rel (%p160) target = $region12
      $region11: #{tpu_custom_call.1} parent=5 // pred_region
        %s164 = ssub.s32 %s14, 1
        // Predicated region
        $region13: #{tpu_custom_call.1} parent=11 // pred_check
          %p165 = pneg %p61
        $region14: #{tpu_custom_call.1} parent=11 // pred_check_branch
          %167 = sbr.rel (%p165) target = $region16
        $region15: #{tpu_custom_call.1} parent=11 // pred_region
          _
        $region16: #{tpu_custom_call.1} parent=11 // pred_fallthru
          _
        // Predicated region
        $region17: #{tpu_custom_call.1} parent=11 // pred_check
          %p168 = pneg %p82
        $region18: #{tpu_custom_call.1} parent=11 // pred_check_branch
          %170 = sbr.rel (%p168) target = $region20
        $region19: #{tpu_custom_call.1} parent=11 // pred_region
          _
        $region20: #{tpu_custom_call.1} parent=11 // pred_fallthru
          _
        // Predicated region
        $region21: #{tpu_custom_call.1} parent=11 // pred_check
          %p171 = pneg %p103
        $region22: #{tpu_custom_call.1} parent=11 // pred_check_branch
          %173 = sbr.rel (%p171) target = $region24
        $region23: #{tpu_custom_call.1} parent=11 // pred_region
          _
        $region24: #{tpu_custom_call.1} parent=11 // pred_fallthru
          _
        // Predicated region
        $region25: #{tpu_custom_call.1} parent=11 // pred_check
          %p174 = pneg %p124
        $region26: #{tpu_custom_call.1} parent=11 // pred_check_branch
          %176 = sbr.rel (%p174) target = $region28
        $region27: #{tpu_custom_call.1} parent=11 // pred_region
          _
        $region28: #{tpu_custom_call.1} parent=11 // pred_fallthru
          _
      $region12: #{tpu_custom_call.1} parent=5 // pred_fallthru
        _
      %p177 = scmp.lt.s32.totalorder %s14, 2
      // Predicated region
      $region29: #{tpu_custom_call.1} parent=5 // pred_check
        %p178 = pneg %p177
      $region30: #{tpu_custom_call.1} parent=5 // pred_check_branch
        %180 = sbr.rel (%p178) target = $region32
      $region31: #{tpu_custom_call.1} parent=5 // pred_region
        // Predicated region
        $region33: #{tpu_custom_call.1} parent=31 // pred_check
          %p181 = pneg %p34
        $region34: #{tpu_custom_call.1} parent=31 // pred_check_branch
          %183 = sbr.rel (%p181) target = $region36
        $region35: #{tpu_custom_call.1} parent=31 // pred_region
          %p184 = scmp.lt.s32.totalorder %s14, 1
          %s185 = scalar_select %p184, %s14, 1
          %s186 = smul.addr %s185, 2
          %s187 = smul.addr %s186, 2
          %s188 = scalar_lea.vmem %s0, %s187
        $region36: #{tpu_custom_call.1} parent=31 // pred_fallthru
          _
      $region32: #{tpu_custom_call.1} parent=5 // pred_fallthru
        _
      %p189 = scmp.le.s32.totalorder 1, %s14
      %p190 = scmp.lt.s32.totalorder %s14, 3
      %p191 = pnand %p189, %p190
      %p192 = pneg %p191
      // Predicated region
      $region37: #{tpu_custom_call.1} parent=5 // pred_check
        _
      $region38: #{tpu_custom_call.1} parent=5 // pred_check_branch
        %194 = sbr.rel (%p191) target = $region40
      $region39: #{tpu_custom_call.1} parent=5 // pred_region
        %s195 = ssub.s32 %s14, 1
        %p196 = scmp.lt.s32.totalorder %s19, 1
        %s197 = scalar_select %p196, %s19, 1
        %s198 = smul.addr %s197, 2
        %s199 = smul.addr %s198, 2
        %s200 = scalar_lea.vmem %s0, %s199
        %p201 = pneg %p40
        %p202 = pneg %p37
        %p203 = pneg %p61
        %p204 = pneg %p58
        %p205 = pneg %p82
        %p206 = pneg %p79
        %p207 = pneg %p103
        %p208 = pneg %p100
        %p209 = pneg %p124
        %p210 = pneg %p121
        %p211 = pneg %p150
        %p212 = pneg %p147
        %s213 = sand.u32 %s137, 1
        %s214 = scalar_lea.sflag [#allocation3], %s213
        %s215 = sand.u32 %s137, 1
        %s216 = smul.addr %s215, 32
        %s217 = scalar_lea.vmem [#allocation2], %s216
        %p218 = scmp.lt.s32.totalorder %s19, 1
        %s219 = scalar_select %p218, %s19, 1
        %s220 = smul.addr %s219, 2
        %s221 = smul.addr %s220, 2
        %s222 = scalar_lea.vmem %s0, %s221
        %v224 = vlaneseq
        %v225 = vand.u32 %v224, 127
        %v226 = vadd.s32 %v225, 128
        %v227 = vand.u32 %v225, 15
        %v228 = vand.u32 %v226, 15
        %vm229 = vcmp.ge.s32.totalorder %v225, 16
        %vm230 = vcmp.ge.s32.totalorder %v226, 16
        %vm231 = vcmp.lt.s32.totalorder %v225, 240
        %vm232 = vcmp.lt.s32.totalorder %v226, 240
        %vm233 = vcmp.ge.s32.totalorder %v227, 1
        %vm234 = vcmp.ge.s32.totalorder %v228, 1
        %vm235 = vcmp.le.s32.totalorder %v227, 14
        %vm236 = vcmp.le.s32.totalorder %v228, 14
        %vm237 = vmand %vm229, %vm233
        %vm238 = vmand %vm230, %vm234
        %v239 = vsel %vm237, 1, 0
        %v240 = vsel %vm238, 1, 0
        %vm241 = vcmp.eq.s32.totalorder %v239, 1
        %vm242 = vcmp.eq.s32.totalorder %v240, 1
        %v243 = vsel %vm229, 1, 0
        %v244 = vsel %vm230, 1, 0
        %vm245 = vcmp.eq.s32.totalorder %v243, 1
        %vm246 = vcmp.eq.s32.totalorder %v244, 1
        %vm247 = vmand %vm229, %vm235
        %vm248 = vmand %vm230, %vm236
        %v249 = vsel %vm247, 1, 0
        %v250 = vsel %vm248, 1, 0
        %vm251 = vcmp.eq.s32.totalorder %v249, 1
        %vm252 = vcmp.eq.s32.totalorder %v250, 1
        %v253 = vsel %vm233, 1, 0
        %v254 = vsel %vm234, 1, 0
        %vm255 = vcmp.eq.s32.totalorder %v253, 1
        %vm256 = vcmp.eq.s32.totalorder %v254, 1
        %v257 = vsel %vm235, 1, 0
        %v258 = vsel %vm236, 1, 0
        %vm259 = vcmp.eq.s32.totalorder %v257, 1
        %vm260 = vcmp.eq.s32.totalorder %v258, 1
        %vm261 = vmand %vm231, %vm233
        %vm262 = vmand %vm232, %vm234
        %v263 = vsel %vm261, 1, 0
        %v264 = vsel %vm262, 1, 0
        %vm265 = vcmp.eq.s32.totalorder %v263, 1
        %vm266 = vcmp.eq.s32.totalorder %v264, 1
        %v267 = vsel %vm231, 1, 0
        %v268 = vsel %vm232, 1, 0
        %vm269 = vcmp.eq.s32.totalorder %v267, 1
        %vm270 = vcmp.eq.s32.totalorder %v268, 1
        %vm271 = vmand %vm231, %vm235
        %vm272 = vmand %vm232, %vm236
        %v273 = vsel %vm271, 1, 0
        %v274 = vsel %vm272, 1, 0
        %vm275 = vcmp.eq.s32.totalorder %v273, 1
        %vm276 = vcmp.eq.s32.totalorder %v274, 1
        %v277 = vld [vmem:[%s1] sm:$0xf]
        %v278 = vld [vmem:[%s2] sm:$0xff]
        %v279 = vld [vmem:[%s3] sm:$0xf]
        %v280 = vld [vmem:[%s3 + $0x4] sm:$0xf]
        %v281 = vld [vmem:[%s3 + $0x8] sm:$0xf]
        %v282 = vld [vmem:[%s3 + $0xc] sm:$0xf]
        %v283 = vld [vmem:[%s4] sm:$0xff]
        %v284 = vld [vmem:[%s4 + $0x8] sm:$0xff]
        %v285 = vld [vmem:[%s4 + $0x10] sm:$0xff]
        %v286 = vld [vmem:[%s4 + $0x18] sm:$0xff]
        %v287 = vld [vmem:[%s222] sm:$0xf]
        %289 = vset.pattern.permute.xlu0 0
        %290 = vperm.xlu0 %289, %v278
        %v291 = vpop.permute.xlu0 %290
        %v295 = vunpack.c.l.s4 1983009808
        %v296 = vunpack.c.0.s8 %v295
        %v297 = vlaneseq
        %v298 = vshrl.u32 %v297, 7
        %v299 = vsub.s32 %v296, %v298
        %v300 = vrot.slane %v287, %v299
        %v301 = vcombine.high %v300, %v300
        %vm302 = vcmask 31744
        %v304 = vsel %vm302, %v277, 0
        %vm306 = vcmask 1041408
        %v308 = vsel %vm306, %v300, 0
        %v311 = vsel %vm306, %v301, 0
        %313 = vmatprep.subr.bf16.mxu0 0
        %314 = vmatpush1.bf16.msra.mxu0 0
        %315 = vmatprep.subr.bf16.mxu0 0
        %316 = vmatpush1.bf16.msra.mxu0 0
        %317 = vmatprep.subr.bf16.mxu0 0
        %318 = vmatpush1.bf16.msra.mxu0 0
        %319 = vmatprep.subr.bf16.mxu0 0
        %320 = vmatpush1.bf16.msra.mxu0 0
        %321 = vmatprep.subr.bf16.mxu0 0
        %322 = vmatpush1.bf16.msra.mxu0 0
        %323 = vmatprep.subr.bf16.mxu0 0
        %324 = vmatpush1.bf16.msra.mxu0 0
        %325 = vmatprep.subr.bf16.mxu0 0
        %326 = vmatpush1.bf16.msra.mxu0 0
        %327 = vmatprep.subr.bf16.mxu0 %v311
        %328 = vmatpush1.bf16.msra.mxu0 %v308
        %329 = vmatprep.subr.bf16.mxu0 0
        %330 = vmatpush2.bf16.msra.mxu0 0
        %331 = vmatprep.subr.bf16.mxu0 0
        %332 = vmatpush2.bf16.msra.mxu0 0
        %333 = vmatprep.subr.bf16.mxu0 0
        %334 = vmatpush2.bf16.msra.mxu0 0
        %335 = vmatprep.subr.bf16.mxu0 0
        %336 = vmatpush2.bf16.msra.mxu0 0
        %337 = vmatprep.subr.bf16.mxu0 0
        %338 = vmatpush2.bf16.msra.mxu0 0
        %339 = vmatprep.subr.bf16.mxu0 0
        %340 = vmatpush2.bf16.msra.mxu0 0
        %341 = vmatprep.subr.bf16.mxu0 0
        %342 = vmatpush2.bf16.msra.mxu0 0
        %343 = vmatprep.subr.bf16.mxu0 0
        %344 = vmatpush2.bf16.msra.mxu0 0
        %345 = vmatprep.mubr.bf16.mxu0 0
        %346 = vmatmul.mubr.bf16.gmra.mxu0 %v304
        %v347 = vpop.f32.mrf.mxu0
        %v348 = vadd.f32 %v291, %v347
        %v349 = vpop.f32.mrf.mxu0
        %v350 = vadd.f32 %v291, %v349
        %v351 = vpop.f32.mrf.mxu0
        %v352 = vpop.f32.mrf.mxu0
        %353 = vdwg.mxu0
        %v354 = vmax.f32 %v348, 0.0
        %v355 = vmax.f32 %v350, 0.0
        %356 = vrot.lane.b32.xlu0 %v354, 17
        %v357 = vpop.permute.xlu0 %356
        %358 = vrot.lane.b32.xlu0 %v355, 17
        %v359 = vpop.permute.xlu0 %358
        %vm360 = vcmp.lt.s32.totalorder %v225, 17
        %v361 = vsel %vm360, %v357, %v359
        %v362 = vsel %vm360, %v359, %v357
        %v363 = vsel %vm241, %v362, 0.0
        %v364 = vsel %vm242, %v361, 0.0
        %v365 = vpack.c.bf16 %v363, %v363
        %v366 = vpack.c.bf16 %v364, %v364
        %367 = vrot.lane.b32.xlu0 %v354, 16
        %v368 = vpop.permute.xlu0 %367
        %369 = vrot.lane.b32.xlu0 %v355, 16
        %v370 = vpop.permute.xlu0 %369
        %vm371 = vcmp.lt.s32.totalorder %v225, 16
        %v372 = vsel %vm371, %v368, %v370
        %v373 = vsel %vm371, %v370, %v368
        %v374 = vsel %vm245, %v373, 0.0
        %v375 = vsel %vm246, %v372, 0.0
        %v376 = vpack.c.bf16 %v374, %v374
        %v377 = vpack.c.bf16 %v375, %v375
        %378 = vrot.lane.b32.xlu0 %v354, 15
        %v379 = vpop.permute.xlu0 %378
        %380 = vrot.lane.b32.xlu0 %v355, 15
        %v381 = vpop.permute.xlu0 %380
        %vm382 = vcmp.lt.s32.totalorder %v225, 15
        %v383 = vsel %vm382, %v379, %v381
        %v384 = vsel %vm382, %v381, %v379
        %v385 = vsel %vm251, %v384, 0.0
        %v386 = vsel %vm252, %v383, 0.0
        %v387 = vpack.c.bf16 %v385, %v385
        %v388 = vpack.c.bf16 %v386, %v386
        %389 = vrot.lane.b32.xlu0 %v354, 1
        %v390 = vpop.permute.xlu0 %389
        %391 = vrot.lane.b32.xlu0 %v355, 1
        %v392 = vpop.permute.xlu0 %391
        %vm393 = vcmp.lt.s32.totalorder %v225, 1
        %v394 = vsel %vm393, %v390, %v392
        %v395 = vsel %vm393, %v392, %v390
        %v396 = vsel %vm255, %v395, 0.0
        %v397 = vsel %vm256, %v394, 0.0
        %v398 = vpack.c.bf16 %v396, %v396
        %v399 = vpack.c.bf16 %v397, %v397
        %v400 = vpack.c.bf16 %v354, %v354
        %v401 = vpack.c.bf16 %v355, %v355
        %402 = vrot.lane.b32.xlu0 %v354, 127
        %v403 = vpop.permute.xlu0 %402
        %404 = vrot.lane.b32.xlu0 %v355, 127
        %v405 = vpop.permute.xlu0 %404
        %vm406 = vcmp.lt.s32.totalorder %v225, 127
        %v407 = vsel %vm406, %v403, %v405
        %v408 = vsel %vm406, %v405, %v403
        %v409 = vsel %vm259, %v407, 0.0
        %v410 = vsel %vm260, %v408, 0.0
        %v411 = vpack.c.bf16 %v409, %v409
        %v412 = vpack.c.bf16 %v410, %v410
        %413 = vrot.lane.b32.xlu0 %v354, 113
        %v414 = vpop.permute.xlu0 %413
        %415 = vrot.lane.b32.xlu0 %v355, 113
        %v416 = vpop.permute.xlu0 %415
        %vm417 = vcmp.lt.s32.totalorder %v225, 113
        %v418 = vsel %vm417, %v414, %v416
        %v419 = vsel %vm417, %v416, %v414
        %v420 = vsel %vm265, %v418, 0.0
        %v421 = vsel %vm266, %v419, 0.0
        %v422 = vpack.c.bf16 %v420, %v420
        %v423 = vpack.c.bf16 %v421, %v421
        %424 = vrot.lane.b32.xlu0 %v354, 112
        %v425 = vpop.permute.xlu0 %424
        %426 = vrot.lane.b32.xlu0 %v355, 112
        %v427 = vpop.permute.xlu0 %426
        %vm428 = vcmp.lt.s32.totalorder %v225, 112
        %v429 = vsel %vm428, %v425, %v427
        %v430 = vsel %vm428, %v427, %v425
        %v431 = vsel %vm269, %v429, 0.0
        %v432 = vsel %vm270, %v430, 0.0
        %v433 = vpack.c.bf16 %v431, %v431
        %v434 = vpack.c.bf16 %v432, %v432
        %435 = vrot.lane.b32.xlu0 %v354, 111
        %v436 = vpop.permute.xlu0 %435
        %437 = vrot.lane.b32.xlu0 %v355, 111
        %v438 = vpop.permute.xlu0 %437
        %vm439 = vcmp.lt.s32.totalorder %v225, 111
        %v440 = vsel %vm439, %v436, %v438
        %v441 = vsel %vm439, %v438, %v436
        %v442 = vsel %vm275, %v440, 0.0
        %v443 = vsel %vm276, %v441, 0.0
        %v444 = vpack.c.bf16 %v442, %v442
        %v445 = vpack.c.bf16 %v443, %v443
        %v448 = vrot.slane %v376, 4
        %v449 = vrot.slane %v377, 4
        %v452 = vrot.slane %v398, 4
        %v453 = vrot.slane %v399, 4
        %v456 = vrot.slane %v411, 4
        %v457 = vrot.slane %v412, 4
        %v460 = vrot.slane %v433, 4
        %v461 = vrot.slane %v434, 4
        %vm462 = vcmask 1043456
        %v465 = vsel %vm462, %v365, %v448
        %v469 = vsel %vm462, %v366, %v449
        %v473 = vsel %vm462, %v387, %v452
        %v477 = vsel %vm462, %v388, %v453
        %v481 = vsel %vm462, %v400, %v456
        %v485 = vsel %vm462, %v401, %v457
        %v489 = vsel %vm462, %v422, %v460
        %v493 = vsel %vm462, %v423, %v461
        %496 = vset.pattern.permute.xlu0 0
        %497 = vperm.xlu0 %496, %v283
        %v498 = vpop.permute.xlu0 %497
        %501 = vset.pattern.permute.xlu0 0
        %502 = vperm.xlu0 %501, %v284
        %v503 = vpop.permute.xlu0 %502
        %506 = vset.pattern.permute.xlu0 0
        %507 = vperm.xlu0 %506, %v285
        %v508 = vpop.permute.xlu0 %507
        %511 = vset.pattern.permute.xlu0 0
        %512 = vperm.xlu0 %511, %v286
        %v513 = vpop.permute.xlu0 %512
        %v519 = vunpack.c.l.b16 %v279
        %v520 = vunpack.c.l.b16 %v280
        %v521 = vunpack.c.l.b16 %v281
        %v522 = vunpack.c.l.b16 %v282
        %v523 = vpack.c.b16 %v520, %v519
        %v524 = vpack.c.b16 %v522, %v521
        %vm525 = vcmask 588800
        %v527 = vsel %vm525, %v523, 0
        %v530 = vsel %vm525, %v524, 0
        %v533 = vsel %vm462, %v444, 0
        %v536 = vsel %vm462, %v445, 0
        %538 = vmatprep.subr.bf16.mxu0 0
        %539 = vmatpush1.bf16.msra.mxu0 0
        %540 = vmatprep.subr.bf16.mxu0 0
        %541 = vmatpush1.bf16.msra.mxu0 0
        %542 = vmatprep.subr.bf16.mxu0 0
        %543 = vmatpush1.bf16.msra.mxu0 0
        %544 = vmatprep.subr.bf16.mxu0 %v536
        %545 = vmatpush1.bf16.msra.mxu0 %v533
        %546 = vmatprep.subr.bf16.mxu0 %v493
        %547 = vmatpush1.bf16.msra.mxu0 %v489
        %548 = vmatprep.subr.bf16.mxu0 %v485
        %549 = vmatpush1.bf16.msra.mxu0 %v481
        %550 = vmatprep.subr.bf16.mxu0 %v477
        %551 = vmatpush1.bf16.msra.mxu0 %v473
        %552 = vmatprep.subr.bf16.mxu0 %v469
        %553 = vmatpush1.bf16.msra.mxu0 %v465
        %554 = vmatprep.subr.bf16.mxu0 0
        %555 = vmatpush2.bf16.msra.mxu0 0
        %556 = vmatprep.subr.bf16.mxu0 0
        %557 = vmatpush2.bf16.msra.mxu0 0
        %558 = vmatprep.subr.bf16.mxu0 0
        %559 = vmatpush2.bf16.msra.mxu0 0
        %560 = vmatprep.subr.bf16.mxu0 0
        %561 = vmatpush2.bf16.msra.mxu0 0
        %562 = vmatprep.subr.bf16.mxu0 0
        %563 = vmatpush2.bf16.msra.mxu0 0
        %564 = vmatprep.subr.bf16.mxu0 0
        %565 = vmatpush2.bf16.msra.mxu0 0
        %566 = vmatprep.subr.bf16.mxu0 0
        %567 = vmatpush2.bf16.msra.mxu0 0
        %568 = vmatprep.subr.bf16.mxu0 0
        %569 = vmatpush2.bf16.msra.mxu0 0
        %570 = vmatprep.mubr.bf16.mxu0 0
        %571 = vmatmul.mubr.bf16.gmra.mxu0 %v527
        %v572 = vpop.f32.mrf.mxu0
        %v573 = vadd.f32 %v498, %v572
        %v574 = vpop.f32.mrf.mxu0
        %v575 = vadd.f32 %v498, %v574
        %v576 = vpop.f32.mrf.mxu0
        %v577 = vadd.f32 %v503, %v576
        %v578 = vpop.f32.mrf.mxu0
        %v579 = vadd.f32 %v503, %v578
        %580 = vmatprep.mubr.bf16.mxu0 0
        %581 = vmatmul.mubr.bf16.gmra.mxu0 %v530
        %v582 = vpop.f32.mrf.mxu0
        %v583 = vadd.f32 %v508, %v582
        %v584 = vpop.f32.mrf.mxu0
        %v585 = vadd.f32 %v508, %v584
        %v586 = vpop.f32.mrf.mxu0
        %v587 = vadd.f32 %v513, %v586
        %v588 = vpop.f32.mrf.mxu0
        %v589 = vadd.f32 %v513, %v588
        %590 = vdwg.mxu0
        %v591 = vmax.f32 %v573, 0.0
        %v592 = vmax.f32 %v575, 0.0
        %v593 = vmax.f32 %v577, 0.0
        %v594 = vmax.f32 %v579, 0.0
        %v595 = vmax.f32 %v583, 0.0
        %v596 = vmax.f32 %v585, 0.0
        %v597 = vmax.f32 %v587, 0.0
        %v598 = vmax.f32 %v589, 0.0
        %v599 = vpack.c.bf16 %v593, %v591
        %v600 = vpack.c.bf16 %v594, %v592
        %v601 = vpack.c.bf16 %v597, %v595
        %v602 = vpack.c.bf16 %v598, %v596
        %v607 = vunpack.c.l.b16 %v599
        %v608 = vunpack.c.l.b16 %v600
        %v609 = vunpack.c.h.b16 %v599
        %v610 = vunpack.c.h.b16 %v600
        %v611 = vunpack.c.l.b16 %v601
        %v612 = vunpack.c.l.b16 %v602
        %v613 = vunpack.c.h.b16 %v601
        %v614 = vunpack.c.h.b16 %v602
        %v615 = vpack.c.b16 %v608, %v607
        %v616 = vpack.c.b16 %v610, %v609
        %v617 = vpack.c.b16 %v612, %v611
        %v618 = vpack.c.b16 %v614, %v613
        %623 = vst [vmem:[%s217] sm:$0xff] %v615
        %624 = vst [vmem:[%s217 + $0x8] sm:$0xff] %v616
        %625 = vst [vmem:[%s217 + $0x10] sm:$0xff] %v617
        %626 = vst [vmem:[%s217 + $0x18] sm:$0xff] %v618
        %s627 = sand.u32 %s137, 1
        %s628 = scalar_lea.sflag [#allocation3], %s627
        %s629 = sand.u32 %s137, 1
        %s630 = smul.addr %s629, 32
        %s631 = scalar_lea.vmem [#allocation2], %s630
        // Predicated region
        $region41: #{tpu_custom_call.1} parent=39 // pred_check
          %p632 = pneg %p147
        $region42: #{tpu_custom_call.1} parent=39 // pred_check_branch
          %634 = sbr.rel (%p632) target = $region44
        $region43: #{tpu_custom_call.1} parent=39 // pred_region
          %s636 = ssub.s32 512, 512
          %637 = vsyncadd %s628, %s636
          %s638 = smul.addr %s19, 8
          %s639 = smul.addr %s638, 64
          %s640 = scalar_lea.hbm %s5, %s639
          %s641 = sshll.u32 %s631, 4
          %s642 = int_to_ptr.vmem [resolvable:$true] %s641
          %647 = dma.vmem_to_hbm [thread:$0]  %s642, 512, %s640, %s628, 128, 128, 8
        $region44: #{tpu_custom_call.1} parent=39 // pred_fallthru
          _
      $region40: #{tpu_custom_call.1} parent=5 // pred_fallthru
        _
      %p648 = scmp.le.s32.totalorder 2, %s14
      // Predicated region
      $region45: #{tpu_custom_call.1} parent=5 // pred_check
        %p649 = pneg %p648
      $region46: #{tpu_custom_call.1} parent=5 // pred_check_branch
        %651 = sbr.rel (%p649) target = $region48
      $region47: #{tpu_custom_call.1} parent=5 // pred_region
        %s652 = ssub.s32 %s14, 2
        // Predicated region
        $region49: #{tpu_custom_call.1} parent=47 // pred_check
          %p653 = pneg %p153
        $region50: #{tpu_custom_call.1} parent=47 // pred_check_branch
          %655 = sbr.rel (%p653) target = $region52
        $region51: #{tpu_custom_call.1} parent=47 // pred_region
          %s656 = sand.u32 %s138, 1
          %s657 = scalar_lea.sflag [#allocation3], %s656
          %s658 = sand.u32 %s138, 1
          %s659 = smul.addr %s658, 32
          %s660 = scalar_lea.vmem [#allocation2], %s659
          %661 = dma.done %s657, 512
        $region52: #{tpu_custom_call.1} parent=47 // pred_fallthru
          _
      $region48: #{tpu_custom_call.1} parent=5 // pred_fallthru
        _
    $region6: #{tpu_custom_call.1} parent=1 // loop_footer
      %s18 = sadd.s32 1, %s14
    $region7: #{tpu_custom_call.1} parent=1 // loop_footer_branch
      %13 = sbr.rel target = $region3
    $region8: #{tpu_custom_call.1} parent=1 // loop_exit
      _
    %662 = vsyncpa [#allocation3], 1
    %s663 = scalar_lea.sflag [#allocation3], 1
    %664 = vsyncpa %s663, 1

</llo_original>
